<compile_context>
chip_gen: v7x
topology: tpu7x:2x2x1
jax: 0.10.0
libtpu: 0.0.40
codegen_flags: <defaults>
</compile_context>

<pallas_src>
import jax
import jax.numpy as jnp
from jax.experimental import pallas as pl
from jax.experimental.pallas import tpu as pltpu

node_class = 10      # number of charge classes (global in the original script)
_LANE = 128          # TPU lane width: pad the class dim to a full vreg lane tile
_NEG_INF = -1e30     # bias value for padded classes -> exp() underflows to 0


def _charge_loss_kernel(x_ref, w_ref, b_ref, y_ref, loss_ref):
    # x_ref   : (tm, D)     f32   one tile of node_repr rows
    # w_ref   : (D, C_pad)  bf16  W^T, zero-padded columns (resident across the grid)
    # b_ref   : (1, C_pad)  f32   bias, padded entries = -1e30 (resident)
    # y_ref   : (tm, 1)     i32   labels for this tile
    # loss_ref: (tm, 1)     f32   per-example cross-entropy loss for this tile
    x = x_ref[...].astype(jnp.bfloat16)      # cast on the VPU, feed the MXU in bf16
    w = w_ref[...]
    b = b_ref[...]

    # Linear: logits = x @ W^T + b  (lane-dense (tm, 128) MXU tile, f32 accumulation).
    logits = jnp.dot(x, w, preferred_element_type=jnp.float32) + b      # (tm, C_pad)

    # Numerically-stable log-sum-exp; padded classes sit at -1e30 and vanish.
    m = jnp.max(logits, axis=-1, keepdims=True)                          # (tm, 1)
    lse = m + jnp.log(jnp.sum(jnp.exp(logits - m), axis=-1, keepdims=True))

    # Target-logit extraction via iota + compare + lane-reduce (no gather on TPU).
    y = y_ref[...]                                                       # (tm, 1) i32
    cls_idx = jax.lax.broadcasted_iota(jnp.int32, logits.shape, 1)       # (tm, C_pad)
    target_logit = jnp.sum(
        jnp.where(cls_idx == y, logits, jnp.float32(0.0)),
        axis=-1, keepdims=True)                                          # (tm, 1)

    # Per-example loss.  Rows beyond N in a partial last block compute garbage here,
    # but Pallas masks their store (out_shape is exactly (N, 1)), so no row mask needed.
    loss_ref[...] = lse - target_logit


def charge_predictor_loss(node_repr, weight, bias, charge_actual, *, tm=512):
    """node_repr: (N, emb_dim) float; weight: (node_class, emb_dim) (PyTorch layout);
    bias: (node_class,); charge_actual: (N,) integer class indices.
    Returns the scalar mean cross-entropy loss (same as nn.CrossEntropyLoss)."""
    n, d = node_repr.shape
    c = weight.shape[0]
    c_pad = pl.cdiv(c, _LANE) * _LANE

    # Row tile: multiple of 8, no larger than N rounded up to 8 (avoids huge tiles
    # for tiny inputs).  Last block may be partial; Pallas handles the edge.
    tm = max(8, min(pl.cdiv(tm, 8) * 8, pl.cdiv(n, 8) * 8))
    n_tiles = pl.cdiv(n, tm)

    # Tiny padded parameters: zero weight columns, -1e30 bias for padded classes.
    w_t = jnp.zeros((d, c_pad), jnp.float32).at[:, :c].set(weight.T.astype(jnp.float32))
    w_t = w_t.astype(jnp.bfloat16)
    b_pad = jnp.full((1, c_pad), _NEG_INF, jnp.float32).at[0, :c].set(
        bias.astype(jnp.float32))

    # No row padding / no extra HBM copy of the activations.
    x = node_repr.astype(jnp.float32)
    y = charge_actual.astype(jnp.int32).reshape(n, 1)

    cost = pl.CostEstimate(
        flops=2 * n * d * c_pad,
        transcendentals=n * c_pad,                     # exp in the softmax
        bytes_accessed=n * d * 4 + n * 4 + d * c_pad * 2 + c_pad * 4 + n * 4,
    )

    per_example = pl.pallas_call(
        _charge_loss_kernel,
        out_shape=jax.ShapeDtypeStruct((n, 1), jnp.float32),
        grid=(n_tiles,),
        in_specs=[
            pl.BlockSpec((tm, d), lambda i: (i, 0)),        # x tile
            pl.BlockSpec((d, c_pad), lambda i: (0, 0)),     # W^T (resident)
            pl.BlockSpec((1, c_pad), lambda i: (0, 0)),     # bias (resident)
            pl.BlockSpec((tm, 1), lambda i: (i, 0)),        # labels tile
        ],
        out_specs=pl.BlockSpec((tm, 1), lambda i: (i, 0)),  # per-example losses
        compiler_params=pltpu.CompilerParams(
            # Per-tile outputs are independent -> fully parallel grid (both v7x TCs).
            dimension_semantics=("parallel",),
            vmem_limit_bytes=48 * 1024 * 1024,   # within v7x's 64 MiB, generous on v5e/v6e
        ),
        cost_estimate=cost,
    )(x, w_t, b_pad, y)

    # Mean reduction over exactly N valid rows (trivial JAX reduction).
    return jnp.sum(per_example) / jnp.float32(n)


if __name__ == "__main__":
    emb_dim = 32
    n_nodes = 8

    key = jax.random.PRNGKey(0)
    k_x, k_w, k_b, k_y = jax.random.split(key, 4)

    # Deterministic synthetic inputs / params (PyTorch Linear default init: U(-1/sqrt(D), 1/sqrt(D))).
    node_repr = jax.random.normal(k_x, (n_nodes, emb_dim), dtype=jnp.float32)
    bound = 1.0 / jnp.sqrt(jnp.float32(emb_dim))
    weight = jax.random.uniform(k_w, (node_class, emb_dim), jnp.float32, -bound, bound)
    bias = jax.random.uniform(k_b, (node_class,), jnp.float32, -bound, bound)
    charge_actual = jax.random.randint(k_y, (n_nodes,), 0, node_class, dtype=jnp.int32)

    loss = charge_predictor_loss(node_repr, weight, bias, charge_actual)
    jax.block_until_ready(loss)

    # Pure-JAX f32 reference (same math as torch.nn.CrossEntropyLoss, mean reduction).
    # Tolerance accounts for the bf16 MXU operands used inside the kernel.
    logits_ref = jnp.dot(node_repr, weight.T, precision=jax.lax.Precision.HIGHEST) + bias
    lse_ref = jax.scipy.special.logsumexp(logits_ref, axis=-1)
    ref = jnp.mean(lse_ref - logits_ref[jnp.arange(n_nodes), charge_actual])
    assert jnp.allclose(loss, ref, atol=1e-2, rtol=1e-2), (loss, ref)

    print("KERNEL_OK")
</pallas_src>

<mosaic_0001>
module attributes {stable_mosaic.version = 11 : i64} {
  func.func @_charge_loss_kernel(%arg0: i32, %arg1: memref<8x32xf32, #tpu.memory_space<vmem>>, %arg2: memref<32x128xbf16, #tpu.memory_space<vmem>>, %arg3: memref<1x128xf32, #tpu.memory_space<vmem>>, %arg4: memref<8x1xi32, #tpu.memory_space<vmem>>, %arg5: memref<8x1xf32, #tpu.memory_space<vmem>>) attributes {dimension_semantics = [#tpu.dimension_semantics<parallel>], iteration_bounds = array<i64: 1>, scalar_prefetch = 0 : i64, scratch_operands = 0 : i64, tpu.core_type = #tpu.core_type<tc>, window_params = [{transform_indices = @transform_0, window_bounds = array<i64: 8, 32>}, {pipeline_mode = #tpu.pipeline_mode<synchronous>, transform_indices = @transform_1, window_bounds = array<i64: 32, 128>}, {pipeline_mode = #tpu.pipeline_mode<synchronous>, transform_indices = @transform_2, window_bounds = array<i64: 1, 128>}, {transform_indices = @transform_3, window_bounds = array<i64: 8, 1>}, {transform_indices = @transform_4, window_bounds = array<i64: 8, 1>}]} {
    %c0 = arith.constant 0 : index
    %c0_0 = arith.constant 0 : index
    %0 = vector.load %arg1[%c0, %c0_0] : memref<8x32xf32, #tpu.memory_space<vmem>>, vector<8x32xf32>
    %1 = arith.truncf %0 : vector<8x32xf32> to vector<8x32xbf16>
    %c0_1 = arith.constant 0 : index
    %c0_2 = arith.constant 0 : index
    %2 = vector.load %arg2[%c0_1, %c0_2] : memref<32x128xbf16, #tpu.memory_space<vmem>>, vector<32x128xbf16>
    %c0_3 = arith.constant 0 : index
    %c0_4 = arith.constant 0 : index
    %3 = vector.load %arg3[%c0_3, %c0_4] : memref<1x128xf32, #tpu.memory_space<vmem>>, vector<1x128xf32>
    %cst = arith.constant dense<0.000000e+00> : vector<8x128xf32>
    %4 = tpu.matmul %1, %2, %cst {dimension_numbers = #tpu.dot_dimension_numbers<[1], [0], [0], [1], [0, 0, 1, 1], [], []>} : vector<8x32xbf16>, vector<32x128xbf16>, vector<8x128xf32> -> vector<8x128xf32>
    %5 = vector.broadcast %3 : vector<1x128xf32> to vector<8x128xf32>
    %6 = arith.addf %4, %5 : vector<8x128xf32>
    %cst_5 = arith.constant dense<0xFF800000> : vector<8xf32>
    %7 = vector.multi_reduction <maximumf>, %6, %cst_5 [1] : vector<8x128xf32> to vector<8xf32>
    %8 = vector.shape_cast %7 : vector<8xf32> to vector<8x1xf32>
    %9 = vector.broadcast %8 : vector<8x1xf32> to vector<8x128xf32>
    %10 = arith.subf %6, %9 : vector<8x128xf32>
    %11 = math.exp %10 : vector<8x128xf32>
    %cst_6 = arith.constant dense<0.000000e+00> : vector<8xf32>
    %12 = vector.multi_reduction <add>, %11, %cst_6 [1] : vector<8x128xf32> to vector<8xf32>
    %13 = vector.shape_cast %12 : vector<8xf32> to vector<8x1xf32>
    %14 = math.log %13 : vector<8x1xf32>
    %15 = arith.addf %8, %14 : vector<8x1xf32>
    %c0_7 = arith.constant 0 : index
    %c0_8 = arith.constant 0 : index
    %16 = vector.load %arg4[%c0_7, %c0_8] : memref<8x1xi32, #tpu.memory_space<vmem>>, vector<8x1xi32>
    %17 = tpu.iota {dimensions = array<i32: 1>} : vector<8x128xi32>
    %18 = vector.broadcast %16 : vector<8x1xi32> to vector<8x128xi32>
    %19 = arith.cmpi eq, %17, %18 : vector<8x128xi32>
    %cst_9 = arith.constant 0.000000e+00 : f32
    %20 = vector.broadcast %cst_9 : f32 to vector<8x128xf32>
    %21 = arith.select %19, %6, %20 : vector<8x128xi1>, vector<8x128xf32>
    %cst_10 = arith.constant dense<0.000000e+00> : vector<8xf32>
    %22 = vector.multi_reduction <add>, %21, %cst_10 [1] : vector<8x128xf32> to vector<8xf32>
    %23 = vector.shape_cast %22 : vector<8xf32> to vector<8x1xf32>
    %24 = arith.subf %15, %23 : vector<8x1xf32>
    %c0_11 = arith.constant 0 : index
    %c0_12 = arith.constant 0 : index
    %25 = vector.load %arg5[%c0_11, %c0_12] : memref<8x1xf32, #tpu.memory_space<vmem>>, vector<8x1xf32>
    tpu.vector_store %arg5[%c0_11, %c0_12], %24 {strides = array<i32>} : memref<8x1xf32, #tpu.memory_space<vmem>>, vector<8x1xf32>,
    return
  }
  func.func @transform_0(%arg0: i32) -> (i32, i32) {
    %c0_i32 = arith.constant 0 : i32
    %c0_i32_0 = arith.constant 0 : i32
    return %arg0, %c0_i32 : i32, i32
  }
  func.func @transform_1(%arg0: i32) -> (i32, i32) {
    %c0_i32 = arith.constant 0 : i32
    %c0_i32_0 = arith.constant 0 : i32
    %c0_i32_1 = arith.constant 0 : i32
    return %c0_i32, %c0_i32_0 : i32, i32
  }
  func.func @transform_2(%arg0: i32) -> (i32, i32) {
    %c0_i32 = arith.constant 0 : i32
    %c0_i32_0 = arith.constant 0 : i32
    %c0_i32_1 = arith.constant 0 : i32
    return %c0_i32, %c0_i32_0 : i32, i32
  }
  func.func @transform_3(%arg0: i32) -> (i32, i32) {
    %c0_i32 = arith.constant 0 : i32
    %c0_i32_0 = arith.constant 0 : i32
    return %arg0, %c0_i32 : i32, i32
  }
  func.func @transform_4(%arg0: i32) -> (i32, i32) {
    %c0_i32 = arith.constant 0 : i32
    %c0_i32_0 = arith.constant 0 : i32
    return %arg0, %c0_i32 : i32, i32
  }
}

</mosaic_0001>

<llo_original>
// kernel: tpu_custom_call.1
$region0: #{tpu_custom_call.1}
  #allocation0 [shape = 'u32[]', space=smem, size = 0x4, offset = 0x4, fixed_abs, tag = 'smem constant byte address 0x4 - core index']
  #allocation1 [shape = 'u32[144,128]{1,0:T(1,128)}', space=vmem, size = 0x12000, scoped, tag = 'internal scratch']
  %s0 = inlined_call_operand.vmem [shape: f32[8,32], index: 0, kind: input, shape index: {}]
  %s1 = inlined_call_operand.hbm [shape: bf16[32,128], index: 1, kind: input, shape index: {}]
  %s2 = inlined_call_operand.vmem [shape: f32[1,128], index: 2, kind: input, shape index: {}]
  %s3 = inlined_call_operand.vmem [shape: s32[8,1], index: 3, kind: input, shape index: {}]
  %s4 = inlined_call_operand.vmem [shape: f32[8,1], index: 4, kind: output, shape index: {}]
  %s5 = sld [smem:[#allocation0]]
  $region30: #{tpu_custom_call.1} parent=0
    _
  %s7 = ssub.s32 1, %s5
  %s8 = scalar_select 0, %s7, %s5
  $region1: #{tpu_custom_call.1} parent=0
    #allocation2 [shape = 'u8[8192]{0}', space=vmem, size = 0x2000, scoped, tag = 'input window, operand 1, single buffered']
    #allocation3 [shape = 's32[1]{0}', space=sflag, size = 0x4, scoped, tag = 'scoped memory for tpu_custom_call.1']
    %9 = vsyncpa [#allocation3], 0
    // Predicated region
    $region2: #{tpu_custom_call.1} parent=1 // pred_check
      _
    $region3: #{tpu_custom_call.1} parent=1 // pred_check_branch
      %11 = sbr.rel (0) target = $region5
    $region4: #{tpu_custom_call.1} parent=1 // pred_region
      _
    $region5: #{tpu_custom_call.1} parent=1 // pred_fallthru
      _
    // Predicated region
    $region6: #{tpu_custom_call.1} parent=1 // pred_check
      _
    $region7: #{tpu_custom_call.1} parent=1 // pred_check_branch
      %13 = sbr.rel (0) target = $region9
    $region8: #{tpu_custom_call.1} parent=1 // pred_region
      %s15 = ssub.s32 256, 256
      %16 = vsyncadd [#allocation3], %s15
      %s17 = sshll.u32 [#allocation2], 4
      %s18 = int_to_ptr.vmem [resolvable:$true] %s17
      %23 = dma.hbm_to_vmem [thread:$0]  %s1, 256, %s18, [#allocation3], 64, 64, 4
    $region9: #{tpu_custom_call.1} parent=1 // pred_fallthru
      _
    // Predicated region
    $region10: #{tpu_custom_call.1} parent=1 // pred_check
      _
    $region11: #{tpu_custom_call.1} parent=1 // pred_check_branch
      %25 = sbr.rel (0) target = $region13
    $region12: #{tpu_custom_call.1} parent=1 // pred_region
      _
    $region13: #{tpu_custom_call.1} parent=1 // pred_fallthru
      _
    // Predicated region
    $region14: #{tpu_custom_call.1} parent=1 // pred_check
      _
    $region15: #{tpu_custom_call.1} parent=1 // pred_check_branch
      %27 = sbr.rel (0) target = $region17
    $region16: #{tpu_custom_call.1} parent=1 // pred_region
      _
    $region17: #{tpu_custom_call.1} parent=1 // pred_fallthru
      _
    // Predicated region
    $region18: #{tpu_custom_call.1} parent=1 // pred_check
      _
    $region19: #{tpu_custom_call.1} parent=1 // pred_check_branch
      %29 = sbr.rel (0) target = $region21
    $region20: #{tpu_custom_call.1} parent=1 // pred_region
      %30 = dma.done [#allocation3], 256
    $region21: #{tpu_custom_call.1} parent=1 // pred_fallthru
      _
    %v32 = vld [vmem:[%s0] sm:$0xff]
    %v33 = vpack.c.bf16 %v32, %v32
    %v34 = vld [vmem:[#allocation2] sm:$0xf]
    %v35 = vld [vmem:[#allocation2 + $0x4] sm:$0xf]
    %v36 = vld [vmem:[#allocation2 + $0x8] sm:$0xf]
    %v37 = vld [vmem:[#allocation2 + $0xc] sm:$0xf]
    %v38 = vld [vmem:[%s2] sm:$0x1]
    %v40 = vlaneseq
    %v41 = vshrl.u32 %v40, 7
    %v42 = vsub.s32 0, %v41
    %v43 = vrot.slane %v38, %v42
    %v49 = vunpack.c.l.b16 %v34
    %v50 = vunpack.c.l.b16 %v35
    %v51 = vunpack.c.l.b16 %v36
    %v52 = vunpack.c.l.b16 %v37
    %v53 = vpack.c.b16 %v50, %v49
    %v54 = vpack.c.b16 %v52, %v51
    %vm57 = vcmask 261120
    %v59 = vsel %vm57, %v33, 0
    %61 = vmatprep.subr.bf16.mxu0 0
    %62 = vmatpush1.bf16.msra.mxu0 %v53
    %63 = vmatprep.subr.bf16.mxu0 0
    %64 = vmatpush1.bf16.msra.mxu0 %v54
    %65 = vmatprep.subr.bf16.mxu0 0
    %66 = vmatpush1.bf16.msra.mxu0 0
    %67 = vmatprep.subr.bf16.mxu0 0
    %68 = vmatpush1.bf16.msra.mxu0 0
    %69 = vmatprep.subr.bf16.mxu0 0
    %70 = vmatpush1.bf16.msra.mxu0 0
    %71 = vmatprep.subr.bf16.mxu0 0
    %72 = vmatpush1.bf16.msra.mxu0 0
    %73 = vmatprep.subr.bf16.mxu0 0
    %74 = vmatpush1.bf16.msra.mxu0 0
    %75 = vmatprep.subr.bf16.mxu0 0
    %76 = vmatpush1.bf16.msra.mxu0 0
    %77 = vmatprep.subr.bf16.mxu0 0
    %78 = vmatpush1.bf16.msra.mxu0 0
    %79 = vmatprep.subr.bf16.mxu0 0
    %80 = vmatpush1.bf16.msra.mxu0 0
    %81 = vmatprep.subr.bf16.mxu0 0
    %82 = vmatpush1.bf16.msra.mxu0 0
    %83 = vmatprep.subr.bf16.mxu0 0
    %84 = vmatpush1.bf16.msra.mxu0 0
    %85 = vmatprep.subr.bf16.mxu0 0
    %86 = vmatpush1.bf16.msra.mxu0 0
    %87 = vmatprep.subr.bf16.mxu0 0
    %88 = vmatpush1.bf16.msra.mxu0 0
    %89 = vmatprep.subr.bf16.mxu0 0
    %90 = vmatpush1.bf16.msra.mxu0 0
    %91 = vmatprep.subr.bf16.mxu0 0
    %92 = vmatpush1.bf16.msra.mxu0 0
    %93 = vmatprep.mubr.bf16.mxu0 0
    %94 = vmatmul.mubr.bf16.gmra.mrb[0].mxu0 %v59
    %v95 = vpop.f32.mrb[0].mxu0
    %v96 = vadd.f32 %v43, %v95
    %v97 = vpop.f32.mrb[0].mxu0
    %v98 = vpop.f32.mrb[0].mxu0
    %v99 = vpop.f32.mrb[0].mxu0
    %100 = vdwg.mxu0
    %101 = vmax.xlane.f32.xlu0 %v96
    %v102 = vpop.xlane.xlu0 %101
    %v103 = vsub.f32 %v96, %v102
    %v104 = vmul.f32 %v103, 1.442695
    %v105 = vpow.pop %v104
    %106 = vadd.xlane.f32.xlu0 %v105
    %v107 = vpop.xlane.xlu0 %106
    %v108 = vlog2.pop %v107
    %v109 = vmul.f32 %v108, 0.6931472
    %v110 = vadd.f32 %v102, %v109
    %v111 = vld [vmem:[%s3] sm:$0xff]
    %v112 = vlaneseq
    %v113 = vand.u32 %v112, 127
    %114 = vset.pattern.permute.xlu0 0
    %115 = vperm.xlu0 %114, %v111
    %v116 = vpop.permute.xlu0 %115
    %vm117 = vcmp.eq.s32.totalorder %v113, %v116
    %v118 = vsel %vm117, %v96, 0.0
    %119 = vadd.xlane.f32.xlu0 %v118
    %v120 = vpop.xlane.xlu0 %119
    %v121 = vsub.f32 %v110, %v120
    %vm122 = vcmask 7168
    %123 = vst.msk [vmem:[%s4] sm:$0xff] %vm122, %v121
    // Predicated region
    $region22: #{tpu_custom_call.1} parent=1 // pred_check
      _
    $region23: #{tpu_custom_call.1} parent=1 // pred_check_branch
      %125 = sbr.rel (0) target = $region25
    $region24: #{tpu_custom_call.1} parent=1 // pred_region
      _
    $region25: #{tpu_custom_call.1} parent=1 // pred_fallthru
      _
    // Predicated region
    $region26: #{tpu_custom_call.1} parent=1 // pred_check
      _
    $region27: #{tpu_custom_call.1} parent=1 // pred_check_branch
      %127 = sbr.rel (0) target = $region29
    $region28: #{tpu_custom_call.1} parent=1 // pred_region
      _
    $region29: #{tpu_custom_call.1} parent=1 // pred_fallthru
      _
    %128 = vsyncpa [#allocation3], 1

</llo_original>
